<compile_context>
chip_gen: v7x
topology: tpu7x:2x2x1
jax: 0.10.0
libtpu: 0.0.40
codegen_flags: <defaults>
</compile_context>

<pallas_src>
import functools

import jax
import jax.numpy as jnp
from jax.experimental import pallas as pl
from jax.experimental.pallas import tpu as pltpu

_LANES = 128

# Dimension-semantics constants (with fallbacks for older jax versions).
_ARBITRARY = getattr(pltpu, "ARBITRARY", "arbitrary")
_CORE_PARALLEL = getattr(pltpu, "CORE_PARALLEL", "parallel")


def _is_multicore_chip():
    """True on chips with >1 TensorCore per chip (v7x). Best-effort probe."""
    try:
        kind = (getattr(jax.devices()[0], "device_kind", "") or "").lower()
        return "v7" in kind
    except Exception:
        return False


def _fold_rows(x):
    """Reduce (R, 128) -> (8, 128) with sublane-aligned VPU adds (R % 8 == 0)."""
    r, lanes = x.shape
    return jnp.sum(x.reshape(r // 8, 8, lanes), axis=0)


def _focal_loss_kernel(pred_ref, gt_ref, out_ref, *, num_tiles, rows_last,
                       chunk_rows):
    """One (tr, 128) tile -> accumulate [loss_sum, pos_count] as (8,128) blocks."""
    c = pl.program_id(0)           # core-split axis
    i = pl.program_id(1)           # reduction axis ("arbitrary")
    steps = pl.num_programs(1)
    tile_idx = c * steps + i

    tr, lanes = pred_ref.shape
    n_chunks = tr // chunk_rows

    @pl.when(i == 0)
    def _():
        out_ref[...] = jnp.zeros_like(out_ref)

    def chunk_terms(j, masked):
        r0 = pl.multiple_of(j * chunk_rows, chunk_rows)
        pred = pred_ref[pl.ds(r0, chunk_rows), :].astype(jnp.float32)
        gt = gt_ref[pl.ds(r0, chunk_rows), :].astype(jnp.float32)

        one_m_pred = 1.0 - pred
        one_m_gt = 1.0 - gt
        nw2 = one_m_gt * one_m_gt
        neg_w = nw2 * nw2                                # (1 - gt)**4
        pos_expr = jnp.log(pred) * (one_m_pred * one_m_pred)
        neg_expr = jnp.log(one_m_pred) * (pred * pred) * neg_w
        is_pos = gt == 1.0
        # Single merged loss term (selects, not mask-multiplies, so garbage /
        # inf in the unselected branch cannot poison the sum).
        loss = jnp.where(is_pos, pos_expr, jnp.where(gt < 1.0, neg_expr, 0.0))
        cnt = is_pos.astype(jnp.float32)
        if masked:
            # Row-granular mask: the main region is 1024-element aligned, so
            # the last tile's valid region is always a whole number of rows.
            row = jax.lax.broadcasted_iota(jnp.int32, (chunk_rows, lanes), 0)
            valid = (r0 + row) < rows_last
            loss = jnp.where(valid, loss, 0.0)
            cnt = jnp.where(valid, cnt, 0.0)
        return loss, cnt

    def accumulate(masked):
        def body(j, carry):
            loss_acc, cnt_acc = carry
            loss, cnt = chunk_terms(j, masked)
            return loss_acc + _fold_rows(loss), cnt_acc + _fold_rows(cnt)

        zero = jnp.zeros((8, lanes), jnp.float32)
        loss_acc, cnt_acc = jax.lax.fori_loop(
            0, n_chunks, body, (zero, zero), unroll=True)
        out_ref[0, 0] += loss_acc
        out_ref[0, 1] += cnt_acc

    # Fast path: full interior tiles, no per-element mask arithmetic.
    @pl.when(tile_idx < num_tiles - 1)
    def _():
        accumulate(False)

    # Last real tile (possibly partial): masked path.
    # Duplicate/clamped tiles (tile_idx >= num_tiles) fall through both whens.
    @pl.when(tile_idx == num_tiles - 1)
    def _():
        accumulate(True)


def focal_loss(pred, gt, *, tile_rows=None, num_cores=None):
    """Pallas implementation of CenterNet's FocalLoss.forward == _neg_loss(pred, gt).

    pred, gt: same-shape arrays (e.g. B, C, H, W). Returns a scalar f32 loss.
    """
    assert pred.shape == gt.shape
    lanes = _LANES
    n = int(pred.size)

    multicore = _is_multicore_chip()
    if num_cores is None:
        num_cores = 2 if multicore else 1
    if tile_rows is None:
        tile_rows = 2048 if multicore else 1024
    assert tile_rows % 8 == 0 and num_cores >= 1

    pred_flat = pred.reshape(-1)
    gt_flat = gt.reshape(-1)

    # (8,128)-aligned prefix through the kernel; the <=1023-element remainder
    # is a tiny XLA epilogue (no host-side pad / extra HBM round trip).
    n_main = (n // (8 * lanes)) * (8 * lanes)
    tail = n - n_main

    loss_sum = jnp.float32(0.0)
    num_pos = jnp.float32(0.0)

    if n_main > 0:
        rows = n_main // lanes                     # multiple of 8
        tr = tile_rows if rows >= tile_rows else rows
        num_tiles = pl.cdiv(rows, tr)
        steps = pl.cdiv(num_tiles, num_cores)
        rows_last = rows - (num_tiles - 1) * tr    # valid rows in the last tile
        chunk_rows = 256 if tr % 256 == 0 else tr

        pred2d = pred_flat[:n_main].reshape(rows, lanes)
        gt2d = gt_flat[:n_main].reshape(rows, lanes)

        def tile_map(c, i):
            # Clamp so DMAs stay in bounds; duplicate tiles are skipped in-kernel.
            return (jnp.minimum(c * steps + i, num_tiles - 1), 0)

        kernel = functools.partial(
            _focal_loss_kernel, num_tiles=num_tiles, rows_last=rows_last,
            chunk_rows=chunk_rows)

        # Only request a cross-TensorCore split on chips that actually have >1
        # TC per chip; otherwise keep the (size-1 or serial) axis "arbitrary".
        axis0 = _CORE_PARALLEL if (num_cores > 1 and multicore) else _ARBITRARY

        partials = pl.pallas_call(
            kernel,
            out_shape=jax.ShapeDtypeStruct((num_cores, 2, 8, lanes), jnp.float32),
            grid_spec=pltpu.PrefetchScalarGridSpec(
                num_scalar_prefetch=0,
                grid=(num_cores, steps),
                in_specs=[
                    pl.BlockSpec((tr, lanes), tile_map),
                    pl.BlockSpec((tr, lanes), tile_map),
                ],
                out_specs=pl.BlockSpec((1, 2, 8, lanes),
                                       lambda c, i: (c, 0, 0, 0)),
            ),
            compiler_params=pltpu.CompilerParams(
                dimension_semantics=(axis0, _ARBITRARY),
            ),
        )(pred2d, gt2d)

        sums = jnp.sum(partials, axis=(0, 2, 3))   # [loss_sum, num_pos]
        loss_sum = loss_sum + sums[0]
        num_pos = num_pos + sums[1]

    if tail > 0:
        p_t = pred_flat[n_main:].astype(jnp.float32)
        g_t = gt_flat[n_main:].astype(jnp.float32)
        is_pos = g_t == 1.0
        pos_e = jnp.log(p_t) * (1.0 - p_t) * (1.0 - p_t)
        neg_e = jnp.log(1.0 - p_t) * p_t * p_t * ((1.0 - g_t) ** 4)
        lt = jnp.where(is_pos, pos_e, jnp.where(g_t < 1.0, neg_e, 0.0))
        loss_sum = loss_sum + jnp.sum(lt)
        num_pos = num_pos + jnp.sum(is_pos.astype(jnp.float32))

    # Reference: -(pos+neg)/num_pos if num_pos>0 else -neg_loss. When
    # num_pos==0 the pos part is 0, so dividing by max(num_pos,1) covers both.
    safe_num_pos = jnp.where(num_pos == 0, 1.0, num_pos)
    return -loss_sum / safe_num_pos


def _focal_loss_ref(pred, gt):
    """Pure-JAX reference mirroring the PyTorch _neg_loss exactly."""
    pred = pred.astype(jnp.float32)
    gt = gt.astype(jnp.float32)
    pos_inds = (gt == 1.0).astype(jnp.float32)
    neg_inds = (gt < 1.0).astype(jnp.float32)
    neg_weights = (1.0 - gt) ** 4
    pos_loss = jnp.sum(jnp.log(pred) * (1.0 - pred) ** 2 * pos_inds)
    neg_loss = jnp.sum(jnp.log(1.0 - pred) * (pred ** 2) * neg_weights * neg_inds)
    num_pos = jnp.sum(pos_inds)
    safe = jnp.where(num_pos == 0, 1.0, num_pos)
    return jnp.where(num_pos == 0, -neg_loss, -(pos_loss + neg_loss) / safe)


if __name__ == "__main__":
    key = jax.random.PRNGKey(0)
    kp, kg = jax.random.split(key)

    # ---- Test 1: NCHW heatmaps, aligned size (exercises the kernel fast path)
    B, C, H, W = 2, 4, 16, 16
    pred = jax.nn.sigmoid(jax.random.normal(kp, (B, C, H, W), dtype=jnp.float32))
    u = jax.random.uniform(kg, (B, C, H, W), dtype=jnp.float32)
    gt = jnp.where(u > 0.97, 1.0, u * 0.9)
    loss = jax.block_until_ready(focal_loss(pred, gt))
    ref = _focal_loss_ref(pred, gt)
    assert jnp.allclose(loss, ref, rtol=1e-5, atol=1e-5), (loss, ref)

    # ---- Test 2: ragged numel (kernel prefix + XLA tail epilogue, no host pad)
    pred2 = jax.nn.sigmoid(jax.random.normal(kp, (2, 3, 17, 23), dtype=jnp.float32))
    u2 = jax.random.uniform(kg, (2, 3, 17, 23), dtype=jnp.float32)
    gt2 = jnp.where(u2 > 0.9, 1.0, u2 * 0.9)
    loss2 = jax.block_until_ready(focal_loss(pred2, gt2))
    ref2 = _focal_loss_ref(pred2, gt2)
    assert jnp.allclose(loss2, ref2, rtol=1e-5, atol=1e-5), (loss2, ref2)

    # ---- Test 3: multi-tile grid with a partial last tile and a duplicate
    # clamped tile (tile_rows=16, num_cores=2 -> grid (2,2) over 3 real tiles).
    pred3 = jax.nn.sigmoid(jax.random.normal(kp, (1, 1, 40, 128), dtype=jnp.float32))
    u3 = jax.random.uniform(kg, (1, 1, 40, 128), dtype=jnp.float32)
    gt3 = jnp.where(u3 > 0.95, 1.0, u3 * 0.9)
    loss3 = jax.block_until_ready(focal_loss(pred3, gt3, tile_rows=16, num_cores=2))
    ref3 = _focal_loss_ref(pred3, gt3)
    assert jnp.allclose(loss3, ref3, rtol=1e-5, atol=1e-5), (loss3, ref3)

    # ---- Test 4: bf16 inputs (half the HBM bytes; cast happens in-kernel)
    up = jax.random.uniform(kp, (B, C, H, W), dtype=jnp.float32)
    pred4 = (0.1 + 0.8 * up).astype(jnp.bfloat16)
    gt4 = gt.astype(jnp.bfloat16)
    loss4 = jax.block_until_ready(focal_loss(pred4, gt4))
    ref4 = _focal_loss_ref(pred4, gt4)
    assert jnp.allclose(loss4, ref4, rtol=1e-5, atol=1e-5), (loss4, ref4)

    print("KERNEL_OK")
</pallas_src>

<mosaic_0001>
module attributes {stable_mosaic.version = 11 : i64} {
  func.func @_focal_loss_kernel(%arg0: i32, %arg1: i32, %arg2: memref<16x128xf32, #tpu.memory_space<vmem>>, %arg3: memref<16x128xf32, #tpu.memory_space<vmem>>, %arg4: memref<1x2x8x128xf32, #tpu.memory_space<vmem>>) attributes {dimension_semantics = [#tpu.dimension_semantics<arbitrary>, #tpu.dimension_semantics<arbitrary>], iteration_bounds = array<i64: 1, 1>, scalar_prefetch = 0 : i64, scratch_operands = 0 : i64, tpu.core_type = #tpu.core_type<tc>, window_params = [{transform_indices = @transform_0, window_bounds = array<i64: 16, 128>}, {transform_indices = @transform_1, window_bounds = array<i64: 16, 128>}, {transform_indices = @transform_2, window_bounds = array<i64: 1, 2, 8, 128>}]} {
    %c1_i32 = arith.constant 1 : i32
    %0 = arith.muli %arg0, %c1_i32 : i32
    %1 = arith.addi %0, %arg1 : i32
    %c0_i32 = arith.constant 0 : i32
    %2 = arith.cmpi eq, %arg1, %c0_i32 : i32
    %3 = arith.extui %2 : i1 to i32
    %c0_i32_0 = arith.constant 0 : i32
    %4 = arith.cmpi ne, %3, %c0_i32_0 : i32
    scf.if %4 {
      %cst = arith.constant 0.000000e+00 : f32
      %11 = vector.broadcast %cst : f32 to vector<1x2x8x128xf32>
      %c0 = arith.constant 0 : index
      %c0_5 = arith.constant 0 : index
      %c0_6 = arith.constant 0 : index
      %c0_7 = arith.constant 0 : index
      %12 = vector.load %arg4[%c0, %c0_5, %c0_6, %c0_7] : memref<1x2x8x128xf32, #tpu.memory_space<vmem>>, vector<1x2x8x128xf32>
      tpu.vector_store %arg4[%c0, %c0_5, %c0_6, %c0_7], %11 {strides = array<i32>} : memref<1x2x8x128xf32, #tpu.memory_space<vmem>>, vector<1x2x8x128xf32>,
    } else {
    }
    %c0_i32_1 = arith.constant 0 : i32
    %5 = arith.cmpi slt, %1, %c0_i32_1 : i32
    %6 = arith.extui %5 : i1 to i32
    %c0_i32_2 = arith.constant 0 : i32
    %7 = arith.cmpi ne, %6, %c0_i32_2 : i32
    scf.if %7 {
      %cst = arith.constant 0.000000e+00 : f32
      %11 = vector.broadcast %cst : f32 to vector<8x128xf32>
      %c0_i32_5 = arith.constant 0 : i32
      %c16_i32 = arith.constant 16 : i32
      %12 = arith.muli %c0_i32_5, %c16_i32 : i32
      %13 = tpu.assume_multiple %12, 16 : i32
      %14 = arith.index_cast %13 : i32 to index
      %c0 = arith.constant 0 : index
      %15 = vector.load %arg2[%14, %c0] : memref<16x128xf32, #tpu.memory_space<vmem>>, vector<16x128xf32>
      %16 = arith.index_cast %13 : i32 to index
      %c0_6 = arith.constant 0 : index
      %17 = vector.load %arg3[%16, %c0_6] : memref<16x128xf32, #tpu.memory_space<vmem>>, vector<16x128xf32>
      %cst_7 = arith.constant 1.000000e+00 : f32
      %18 = vector.broadcast %cst_7 : f32 to vector<16x128xf32>
      %19 = arith.subf %18, %15 : vector<16x128xf32>
      %cst_8 = arith.constant 1.000000e+00 : f32
      %20 = vector.broadcast %cst_8 : f32 to vector<16x128xf32>
      %21 = arith.subf %20, %17 : vector<16x128xf32>
      %22 = arith.mulf %21, %21 : vector<16x128xf32>
      %23 = arith.mulf %22, %22 : vector<16x128xf32>
      %24 = math.log %15 : vector<16x128xf32>
      %25 = arith.mulf %19, %19 : vector<16x128xf32>
      %26 = arith.mulf %24, %25 : vector<16x128xf32>
      %27 = math.log %19 : vector<16x128xf32>
      %28 = arith.mulf %15, %15 : vector<16x128xf32>
      %29 = arith.mulf %27, %28 : vector<16x128xf32>
      %30 = arith.mulf %29, %23 : vector<16x128xf32>
      %cst_9 = arith.constant 1.000000e+00 : f32
      %31 = vector.broadcast %cst_9 : f32 to vector<16x128xf32>
      %32 = arith.cmpf oeq, %17, %31 : vector<16x128xf32>
      %cst_10 = arith.constant 1.000000e+00 : f32
      %33 = vector.broadcast %cst_10 : f32 to vector<16x128xf32>
      %34 = arith.cmpf olt, %17, %33 : vector<16x128xf32>
      %cst_11 = arith.constant 0.000000e+00 : f32
      %35 = vector.broadcast %cst_11 : f32 to vector<16x128xf32>
      %36 = arith.select %34, %30, %35 : vector<16x128xi1>, vector<16x128xf32>
      %37 = arith.select %32, %26, %36 : vector<16x128xi1>, vector<16x128xf32>
      %38 = arith.extui %32 : vector<16x128xi1> to vector<16x128xi32>
      %39 = arith.sitofp %38 : vector<16x128xi32> to vector<16x128xf32>
      %40 = vector.shape_cast %37 : vector<16x128xf32> to vector<2x8x128xf32>
      %cst_12 = arith.constant dense<0.000000e+00> : vector<8x128xf32>
      %41 = vector.multi_reduction <add>, %40, %cst_12 [0] : vector<2x8x128xf32> to vector<8x128xf32>
      %42 = arith.addf %11, %41 : vector<8x128xf32>
      %43 = vector.shape_cast %39 : vector<16x128xf32> to vector<2x8x128xf32>
      %cst_13 = arith.constant dense<0.000000e+00> : vector<8x128xf32>
      %44 = vector.multi_reduction <add>, %43, %cst_13 [0] : vector<2x8x128xf32> to vector<8x128xf32>
      %45 = arith.addf %11, %44 : vector<8x128xf32>
      %c1_i32_14 = arith.constant 1 : i32
      %c0_15 = arith.constant 0 : index
      %c0_16 = arith.constant 0 : index
      %c0_17 = arith.constant 0 : index
      %c0_18 = arith.constant 0 : index
      %46 = vector.load %arg4[%c0_15, %c0_16, %c0_17, %c0_18] : memref<1x2x8x128xf32, #tpu.memory_space<vmem>>, vector<1x1x8x128xf32>
      %47 = vector.shape_cast %46 : vector<1x1x8x128xf32> to vector<8x128xf32>
      %48 = arith.addf %47, %42 : vector<8x128xf32>
      %c0_19 = arith.constant 0 : index
      %c0_20 = arith.constant 0 : index
      %c0_21 = arith.constant 0 : index
      %c0_22 = arith.constant 0 : index
      %49 = vector.load %arg4[%c0_19, %c0_20, %c0_21, %c0_22] : memref<1x2x8x128xf32, #tpu.memory_space<vmem>>, vector<1x1x8x128xf32>
      %50 = vector.shape_cast %49 : vector<1x1x8x128xf32> to vector<8x128xf32>
      %51 = vector.shape_cast %48 : vector<8x128xf32> to vector<1x1x8x128xf32>
      tpu.vector_store %arg4[%c0_19, %c0_20, %c0_21, %c0_22], %51 {strides = array<i32>} : memref<1x2x8x128xf32, #tpu.memory_space<vmem>>, vector<1x1x8x128xf32>,
      %c0_23 = arith.constant 0 : index
      %c1 = arith.constant 1 : index
      %c0_24 = arith.constant 0 : index
      %c0_25 = arith.constant 0 : index
      %52 = vector.load %arg4[%c0_23, %c1, %c0_24, %c0_25] : memref<1x2x8x128xf32, #tpu.memory_space<vmem>>, vector<1x1x8x128xf32>
      %53 = vector.shape_cast %52 : vector<1x1x8x128xf32> to vector<8x128xf32>
      %54 = arith.addf %53, %45 : vector<8x128xf32>
      %c0_26 = arith.constant 0 : index
      %c1_27 = arith.constant 1 : index
      %c0_28 = arith.constant 0 : index
      %c0_29 = arith.constant 0 : index
      %55 = vector.load %arg4[%c0_26, %c1_27, %c0_28, %c0_29] : memref<1x2x8x128xf32, #tpu.memory_space<vmem>>, vector<1x1x8x128xf32>
      %56 = vector.shape_cast %55 : vector<1x1x8x128xf32> to vector<8x128xf32>
      %57 = vector.shape_cast %54 : vector<8x128xf32> to vector<1x1x8x128xf32>
      tpu.vector_store %arg4[%c0_26, %c1_27, %c0_28, %c0_29], %57 {strides = array<i32>} : memref<1x2x8x128xf32, #tpu.memory_space<vmem>>, vector<1x1x8x128xf32>,
    } else {
    }
    %c0_i32_3 = arith.constant 0 : i32
    %8 = arith.cmpi eq, %1, %c0_i32_3 : i32
    %9 = arith.extui %8 : i1 to i32
    %c0_i32_4 = arith.constant 0 : i32
    %10 = arith.cmpi ne, %9, %c0_i32_4 : i32
    scf.if %10 {
      %cst = arith.constant 0.000000e+00 : f32
      %11 = vector.broadcast %cst : f32 to vector<8x128xf32>
      %c0_i32_5 = arith.constant 0 : i32
      %c16_i32 = arith.constant 16 : i32
      %12 = arith.muli %c0_i32_5, %c16_i32 : i32
      %13 = tpu.assume_multiple %12, 16 : i32
      %14 = arith.index_cast %13 : i32 to index
      %c0 = arith.constant 0 : index
      %15 = vector.load %arg2[%14, %c0] : memref<16x128xf32, #tpu.memory_space<vmem>>, vector<16x128xf32>
      %16 = arith.index_cast %13 : i32 to index
      %c0_6 = arith.constant 0 : index
      %17 = vector.load %arg3[%16, %c0_6] : memref<16x128xf32, #tpu.memory_space<vmem>>, vector<16x128xf32>
      %cst_7 = arith.constant 1.000000e+00 : f32
      %18 = vector.broadcast %cst_7 : f32 to vector<16x128xf32>
      %19 = arith.subf %18, %15 : vector<16x128xf32>
      %cst_8 = arith.constant 1.000000e+00 : f32
      %20 = vector.broadcast %cst_8 : f32 to vector<16x128xf32>
      %21 = arith.subf %20, %17 : vector<16x128xf32>
      %22 = arith.mulf %21, %21 : vector<16x128xf32>
      %23 = arith.mulf %22, %22 : vector<16x128xf32>
      %24 = math.log %15 : vector<16x128xf32>
      %25 = arith.mulf %19, %19 : vector<16x128xf32>
      %26 = arith.mulf %24, %25 : vector<16x128xf32>
      %27 = math.log %19 : vector<16x128xf32>
      %28 = arith.mulf %15, %15 : vector<16x128xf32>
      %29 = arith.mulf %27, %28 : vector<16x128xf32>
      %30 = arith.mulf %29, %23 : vector<16x128xf32>
      %cst_9 = arith.constant 1.000000e+00 : f32
      %31 = vector.broadcast %cst_9 : f32 to vector<16x128xf32>
      %32 = arith.cmpf oeq, %17, %31 : vector<16x128xf32>
      %cst_10 = arith.constant 1.000000e+00 : f32
      %33 = vector.broadcast %cst_10 : f32 to vector<16x128xf32>
      %34 = arith.cmpf olt, %17, %33 : vector<16x128xf32>
      %cst_11 = arith.constant 0.000000e+00 : f32
      %35 = vector.broadcast %cst_11 : f32 to vector<16x128xf32>
      %36 = arith.select %34, %30, %35 : vector<16x128xi1>, vector<16x128xf32>
      %37 = arith.select %32, %26, %36 : vector<16x128xi1>, vector<16x128xf32>
      %38 = arith.extui %32 : vector<16x128xi1> to vector<16x128xi32>
      %39 = arith.sitofp %38 : vector<16x128xi32> to vector<16x128xf32>
      %40 = tpu.iota {dimensions = array<i32: 0>} : vector<16x128xi32>
      %41 = vector.broadcast %13 : i32 to vector<16x128xi32>
      %42 = arith.addi %41, %40 : vector<16x128xi32>
      %c16_i32_12 = arith.constant 16 : i32
      %43 = vector.broadcast %c16_i32_12 : i32 to vector<16x128xi32>
      %44 = arith.cmpi slt, %42, %43 : vector<16x128xi32>
      %cst_13 = arith.constant 0.000000e+00 : f32
      %45 = vector.broadcast %cst_13 : f32 to vector<16x128xf32>
      %46 = arith.select %44, %37, %45 : vector<16x128xi1>, vector<16x128xf32>
      %cst_14 = arith.constant 0.000000e+00 : f32
      %47 = vector.broadcast %cst_14 : f32 to vector<16x128xf32>
      %48 = arith.select %44, %39, %47 : vector<16x128xi1>, vector<16x128xf32>
      %49 = vector.shape_cast %46 : vector<16x128xf32> to vector<2x8x128xf32>
      %cst_15 = arith.constant dense<0.000000e+00> : vector<8x128xf32>
      %50 = vector.multi_reduction <add>, %49, %cst_15 [0] : vector<2x8x128xf32> to vector<8x128xf32>
      %51 = arith.addf %11, %50 : vector<8x128xf32>
      %52 = vector.shape_cast %48 : vector<16x128xf32> to vector<2x8x128xf32>
      %cst_16 = arith.constant dense<0.000000e+00> : vector<8x128xf32>
      %53 = vector.multi_reduction <add>, %52, %cst_16 [0] : vector<2x8x128xf32> to vector<8x128xf32>
      %54 = arith.addf %11, %53 : vector<8x128xf32>
      %c1_i32_17 = arith.constant 1 : i32
      %c0_18 = arith.constant 0 : index
      %c0_19 = arith.constant 0 : index
      %c0_20 = arith.constant 0 : index
      %c0_21 = arith.constant 0 : index
      %55 = vector.load %arg4[%c0_18, %c0_19, %c0_20, %c0_21] : memref<1x2x8x128xf32, #tpu.memory_space<vmem>>, vector<1x1x8x128xf32>
      %56 = vector.shape_cast %55 : vector<1x1x8x128xf32> to vector<8x128xf32>
      %57 = arith.addf %56, %51 : vector<8x128xf32>
      %c0_22 = arith.constant 0 : index
      %c0_23 = arith.constant 0 : index
      %c0_24 = arith.constant 0 : index
      %c0_25 = arith.constant 0 : index
      %58 = vector.load %arg4[%c0_22, %c0_23, %c0_24, %c0_25] : memref<1x2x8x128xf32, #tpu.memory_space<vmem>>, vector<1x1x8x128xf32>
      %59 = vector.shape_cast %58 : vector<1x1x8x128xf32> to vector<8x128xf32>
      %60 = vector.shape_cast %57 : vector<8x128xf32> to vector<1x1x8x128xf32>
      tpu.vector_store %arg4[%c0_22, %c0_23, %c0_24, %c0_25], %60 {strides = array<i32>} : memref<1x2x8x128xf32, #tpu.memory_space<vmem>>, vector<1x1x8x128xf32>,
      %c0_26 = arith.constant 0 : index
      %c1 = arith.constant 1 : index
      %c0_27 = arith.constant 0 : index
      %c0_28 = arith.constant 0 : index
      %61 = vector.load %arg4[%c0_26, %c1, %c0_27, %c0_28] : memref<1x2x8x128xf32, #tpu.memory_space<vmem>>, vector<1x1x8x128xf32>
      %62 = vector.shape_cast %61 : vector<1x1x8x128xf32> to vector<8x128xf32>
      %63 = arith.addf %62, %54 : vector<8x128xf32>
      %c0_29 = arith.constant 0 : index
      %c1_30 = arith.constant 1 : index
      %c0_31 = arith.constant 0 : index
      %c0_32 = arith.constant 0 : index
      %64 = vector.load %arg4[%c0_29, %c1_30, %c0_31, %c0_32] : memref<1x2x8x128xf32, #tpu.memory_space<vmem>>, vector<1x1x8x128xf32>
      %65 = vector.shape_cast %64 : vector<1x1x8x128xf32> to vector<8x128xf32>
      %66 = vector.shape_cast %63 : vector<8x128xf32> to vector<1x1x8x128xf32>
      tpu.vector_store %arg4[%c0_29, %c1_30, %c0_31, %c0_32], %66 {strides = array<i32>} : memref<1x2x8x128xf32, #tpu.memory_space<vmem>>, vector<1x1x8x128xf32>,
    } else {
    }
    return
  }
  func.func @transform_0(%arg0: i32, %arg1: i32) -> (i32, i32) {
    %c1_i32 = arith.constant 1 : i32
    %0 = arith.muli %arg0, %c1_i32 : i32
    %1 = arith.addi %0, %arg1 : i32
    %c0_i32 = arith.constant 0 : i32
    %2 = arith.minsi %1, %c0_i32 : i32
    %c0_i32_0 = arith.constant 0 : i32
    %c0_i32_1 = arith.constant 0 : i32
    return %2, %c0_i32_0 : i32, i32
  }
  func.func @transform_1(%arg0: i32, %arg1: i32) -> (i32, i32) {
    %c1_i32 = arith.constant 1 : i32
    %0 = arith.muli %arg0, %c1_i32 : i32
    %1 = arith.addi %0, %arg1 : i32
    %c0_i32 = arith.constant 0 : i32
    %2 = arith.minsi %1, %c0_i32 : i32
    %c0_i32_0 = arith.constant 0 : i32
    %c0_i32_1 = arith.constant 0 : i32
    return %2, %c0_i32_0 : i32, i32
  }
  func.func @transform_2(%arg0: i32, %arg1: i32) -> (i32, i32, i32, i32) {
    %c0_i32 = arith.constant 0 : i32
    %c0_i32_0 = arith.constant 0 : i32
    %c0_i32_1 = arith.constant 0 : i32
    %c0_i32_2 = arith.constant 0 : i32
    return %arg0, %c0_i32, %c0_i32_0, %c0_i32_1 : i32, i32, i32, i32
  }
}

</mosaic_0001>

<llo_original>
// kernel: tpu_custom_call.1
$region0: #{tpu_custom_call.1}
  #allocation0 [shape = 'u32[]', space=smem, size = 0x4, offset = 0x4, fixed_abs, tag = 'smem constant byte address 0x4 - core index']
  #allocation1 [shape = 'u32[144,128]{1,0:T(1,128)}', space=vmem, size = 0x12000, scoped, tag = 'internal scratch']
  %s0 = inlined_call_operand.hbm [shape: f32[16,128], index: 0, kind: input, shape index: {}]
  %s1 = inlined_call_operand.hbm [shape: f32[16,128], index: 1, kind: input, shape index: {}]
  %s2 = inlined_call_operand.hbm [shape: f32[1,2,8,128], index: 2, kind: output, shape index: {}]
  %s3 = sld [smem:[#allocation0]]
  $region38: #{tpu_custom_call.1} parent=0
    _
  %s5 = ssub.s32 1, %s3
  %s6 = scalar_select 0, %s5, %s3
  $region1: #{tpu_custom_call.1} parent=0
    #allocation2 [shape = 'u8[8192]{0}', space=vmem, size = 0x2000, scoped, tag = 'input window, operand 0, single buffered']
    #allocation3 [shape = 's32[1]{0}', space=sflag, size = 0x4, scoped, tag = 'scoped memory for tpu_custom_call.1']
    #allocation4 [shape = 's32[1]{0}', space=sflag, size = 0x4, scoped, tag = 'scoped memory for tpu_custom_call.1']
    #allocation5 [shape = 'u8[8192]{0}', space=vmem, size = 0x2000, scoped, tag = 'input window, operand 1, single buffered']
    #allocation6 [shape = 's32[1]{0}', space=sflag, size = 0x4, scoped, tag = 'scoped memory for tpu_custom_call.1']
    #allocation7 [shape = 'u8[8192]{0}', space=vmem, size = 0x2000, scoped, tag = 'output window, operand 0, single buffered']
    %7 = vsyncpa [#allocation3], 0
    %8 = vsyncpa [#allocation6], 0
    %9 = vsyncpa [#allocation4], 0
    // Predicated region
    $region2: #{tpu_custom_call.1} parent=1 // pred_check
      _
    $region3: #{tpu_custom_call.1} parent=1 // pred_check_branch
      %11 = sbr.rel (0) target = $region5
    $region4: #{tpu_custom_call.1} parent=1 // pred_region
      %s12 = sadd.s32 0, 0
      %p13 = scmp.lt.s32.totalorder %s12, 0
      %s14 = scalar_select %p13, %s12, 0
      %s15 = smul.u32 2, %s14
      %s17 = ssub.s32 256, 256
      %18 = vsyncadd [#allocation3], %s17
      %s19 = smul.addr %s15, 128
      %s20 = scalar_lea.hbm %s0, %s19
      %s21 = sshll.u32 [#allocation2], 4
      %s22 = int_to_ptr.vmem [resolvable:$true] %s21
      %27 = dma.hbm_to_vmem [thread:$0]  %s20, 256, %s22, [#allocation3], 128, 128, 8
    $region5: #{tpu_custom_call.1} parent=1 // pred_fallthru
      _
    // Predicated region
    $region6: #{tpu_custom_call.1} parent=1 // pred_check
      _
    $region7: #{tpu_custom_call.1} parent=1 // pred_check_branch
      %29 = sbr.rel (0) target = $region9
    $region8: #{tpu_custom_call.1} parent=1 // pred_region
      %s30 = sadd.s32 0, 0
      %p31 = scmp.lt.s32.totalorder %s30, 0
      %s32 = scalar_select %p31, %s30, 0
      %s33 = smul.u32 2, %s32
      %s35 = ssub.s32 256, 256
      %36 = vsyncadd [#allocation6], %s35
      %s37 = smul.addr %s33, 128
      %s38 = scalar_lea.hbm %s1, %s37
      %s39 = sshll.u32 [#allocation5], 4
      %s40 = int_to_ptr.vmem [resolvable:$true] %s39
      %45 = dma.hbm_to_vmem [thread:$0]  %s38, 256, %s40, [#allocation6], 128, 128, 8
    $region9: #{tpu_custom_call.1} parent=1 // pred_fallthru
      _
    // Predicated region
    $region10: #{tpu_custom_call.1} parent=1 // pred_check
      _
    $region11: #{tpu_custom_call.1} parent=1 // pred_check_branch
      %47 = sbr.rel (0) target = $region13
    $region12: #{tpu_custom_call.1} parent=1 // pred_region
      %48 = dma.done [#allocation3], 256
    $region13: #{tpu_custom_call.1} parent=1 // pred_fallthru
      _
    // Predicated region
    $region14: #{tpu_custom_call.1} parent=1 // pred_check
      _
    $region15: #{tpu_custom_call.1} parent=1 // pred_check_branch
      %50 = sbr.rel (0) target = $region17
    $region16: #{tpu_custom_call.1} parent=1 // pred_region
      %51 = dma.done [#allocation6], 256
    $region17: #{tpu_custom_call.1} parent=1 // pred_fallthru
      _
    %s52 = sadd.s32 0, 0
    %p53 = scmp.lt.s32.totalorder %s52, 0
    %s54 = scalar_select %p53, %s52, 0
    %s55 = smul.u32 2, %s54
    %s56 = sadd.s32 0, 0
    %p57 = scmp.lt.s32.totalorder %s56, 0
    %s58 = scalar_select %p57, %s56, 0
    %s59 = smul.u32 2, %s58
    %s60 = sadd.s32 0, 0
    %p61 = scmp.eq.s32.totalorder 0, 0
    // Predicated region
    $region18: #{tpu_custom_call.1} parent=1 // pred_check
      %p62 = pneg %p61
    $region19: #{tpu_custom_call.1} parent=1 // pred_check_branch
      %64 = sbr.rel (%p62) target = $region21
    $region20: #{tpu_custom_call.1} parent=1 // pred_region
      %65 = vst [vmem:[#allocation7] sm:$0xff] 0.0
      %66 = vst [vmem:[#allocation7 + $0x8] sm:$0xff] 0.0
    $region21: #{tpu_custom_call.1} parent=1 // pred_fallthru
      _
    %p67 = scmp.lt.s32.totalorder %s60, 0
    // Predicated region
    $region22: #{tpu_custom_call.1} parent=1 // pred_check
      %p68 = pneg %p67
    $region23: #{tpu_custom_call.1} parent=1 // pred_check_branch
      %70 = sbr.rel (%p68) target = $region25
    $region24: #{tpu_custom_call.1} parent=1 // pred_region
      %v71 = vld [vmem:[#allocation2] sm:$0xff]
      %v72 = vld [vmem:[#allocation2 + $0x8] sm:$0xff]
      %v73 = vld [vmem:[#allocation5] sm:$0xff]
      %v74 = vld [vmem:[#allocation5 + $0x8] sm:$0xff]
      %v75 = vsub.f32 1.0, %v71
      %v76 = vsub.f32 1.0, %v72
      %v77 = vsub.f32 1.0, %v73
      %v78 = vsub.f32 1.0, %v74
      %v79 = vmul.f32 %v77, %v77
      %v80 = vmul.f32 %v78, %v78
      %v81 = vmul.f32 %v79, %v79
      %v82 = vmul.f32 %v80, %v80
      %v83 = vlog2.pop %v71
      %v84 = vmul.f32 %v83, 0.6931472
      %v85 = vlog2.pop %v72
      %v86 = vmul.f32 %v85, 0.6931472
      %v87 = vmul.f32 %v75, %v75
      %v88 = vmul.f32 %v76, %v76
      %v89 = vmul.f32 %v84, %v87
      %v90 = vmul.f32 %v86, %v88
      %v91 = vlog2.pop %v75
      %v92 = vmul.f32 %v91, 0.6931472
      %v93 = vlog2.pop %v76
      %v94 = vmul.f32 %v93, 0.6931472
      %v95 = vmul.f32 %v71, %v71
      %v96 = vmul.f32 %v72, %v72
      %v97 = vmul.f32 %v92, %v95
      %v98 = vmul.f32 %v94, %v96
      %v99 = vmul.f32 %v97, %v81
      %v100 = vmul.f32 %v98, %v82
      %vm101 = vcmp.eq.f32.partialorder %v73, 1.0
      %vm102 = vcmp.eq.f32.partialorder %v74, 1.0
      %vm103 = vcmp.lt.f32.partialorder %v73, 1.0
      %vm104 = vcmp.lt.f32.partialorder %v74, 1.0
      %v105 = vsel %vm103, %v99, 0.0
      %v106 = vsel %vm104, %v100, 0.0
      %v107 = vsel %vm101, %v89, %v105
      %v108 = vsel %vm102, %v90, %v106
      %v109 = vsel %vm101, 1, 0
      %v110 = vsel %vm102, 1, 0
      %v111 = vcvt.s32.f32 %v109
      %v112 = vcvt.s32.f32 %v110
      %v113 = vadd.f32 %v107, %v108
      %v114 = vadd.f32 %v113, 0.0
      %v115 = vadd.f32 %v111, %v112
      %v116 = vadd.f32 %v115, 0.0
      %v117 = vld [vmem:[#allocation7] sm:$0xff]
      %v118 = vadd.f32 %v117, %v114
      %119 = vst [vmem:[#allocation7] sm:$0xff] %v118
      %s120 = scalar_lea.vmem [#allocation7], 8
      %v121 = vld [vmem:[%s120] sm:$0xff]
      %v122 = vadd.f32 %v121, %v116
      %123 = vst [vmem:[%s120] sm:$0xff] %v122
    $region25: #{tpu_custom_call.1} parent=1 // pred_fallthru
      _
    %p124 = scmp.eq.s32.totalorder %s60, 0
    // Predicated region
    $region26: #{tpu_custom_call.1} parent=1 // pred_check
      %p125 = pneg %p124
    $region27: #{tpu_custom_call.1} parent=1 // pred_check_branch
      %127 = sbr.rel (%p125) target = $region29
    $region28: #{tpu_custom_call.1} parent=1 // pred_region
      %v128 = vld [vmem:[#allocation2] sm:$0xff]
      %v129 = vld [vmem:[#allocation2 + $0x8] sm:$0xff]
      %v130 = vld [vmem:[#allocation5] sm:$0xff]
      %v131 = vld [vmem:[#allocation5 + $0x8] sm:$0xff]
      %v132 = vsub.f32 1.0, %v128
      %v133 = vsub.f32 1.0, %v129
      %v134 = vsub.f32 1.0, %v130
      %v135 = vsub.f32 1.0, %v131
      %v136 = vmul.f32 %v134, %v134
      %v137 = vmul.f32 %v135, %v135
      %v138 = vmul.f32 %v136, %v136
      %v139 = vmul.f32 %v137, %v137
      %v140 = vlog2.pop %v128
      %v141 = vmul.f32 %v140, 0.6931472
      %v142 = vlog2.pop %v129
      %v143 = vmul.f32 %v142, 0.6931472
      %v144 = vmul.f32 %v132, %v132
      %v145 = vmul.f32 %v133, %v133
      %v146 = vmul.f32 %v141, %v144
      %v147 = vmul.f32 %v143, %v145
      %v148 = vlog2.pop %v132
      %v149 = vmul.f32 %v148, 0.6931472
      %v150 = vlog2.pop %v133
      %v151 = vmul.f32 %v150, 0.6931472
      %v152 = vmul.f32 %v128, %v128
      %v153 = vmul.f32 %v129, %v129
      %v154 = vmul.f32 %v149, %v152
      %v155 = vmul.f32 %v151, %v153
      %v156 = vmul.f32 %v154, %v138
      %v157 = vmul.f32 %v155, %v139
      %vm158 = vcmp.eq.f32.partialorder %v130, 1.0
      %vm159 = vcmp.eq.f32.partialorder %v131, 1.0
      %vm160 = vcmp.lt.f32.partialorder %v130, 1.0
      %vm161 = vcmp.lt.f32.partialorder %v131, 1.0
      %v162 = vsel %vm160, %v156, 0.0
      %v163 = vsel %vm161, %v157, 0.0
      %v164 = vsel %vm158, %v146, %v162
      %v165 = vsel %vm159, %v147, %v163
      %v166 = vsel %vm158, 1, 0
      %v167 = vsel %vm159, 1, 0
      %v168 = vcvt.s32.f32 %v166
      %v169 = vcvt.s32.f32 %v167
      %v170 = vlaneseq
      %v171 = vshrl.u32 %v170, 7
      %v172 = vadd.s32 %v171, 8
      %v173 = vstv 0
      %v174 = vadd.s32 %v173, %v171
      %v175 = vadd.s32 %v173, %v172
      %vm176 = vcmp.lt.s32.totalorder %v174, 16
      %vm177 = vcmp.lt.s32.totalorder %v175, 16
      %v178 = vsel %vm176, %v164, 0.0
      %v179 = vsel %vm177, %v165, 0.0
      %v180 = vsel %vm176, %v168, 0.0
      %v181 = vsel %vm177, %v169, 0.0
      %v182 = vadd.f32 %v178, %v179
      %v183 = vadd.f32 %v182, 0.0
      %v184 = vadd.f32 %v180, %v181
      %v185 = vadd.f32 %v184, 0.0
      %v186 = vld [vmem:[#allocation7] sm:$0xff]
      %v187 = vadd.f32 %v186, %v183
      %188 = vst [vmem:[#allocation7] sm:$0xff] %v187
      %s189 = scalar_lea.vmem [#allocation7], 8
      %v190 = vld [vmem:[%s189] sm:$0xff]
      %v191 = vadd.f32 %v190, %v185
      %192 = vst [vmem:[%s189] sm:$0xff] %v191
    $region29: #{tpu_custom_call.1} parent=1 // pred_fallthru
      _
    // Predicated region
    $region30: #{tpu_custom_call.1} parent=1 // pred_check
      _
    $region31: #{tpu_custom_call.1} parent=1 // pred_check_branch
      %194 = sbr.rel (0) target = $region33
    $region32: #{tpu_custom_call.1} parent=1 // pred_region
      %s196 = ssub.s32 256, 256
      %197 = vsyncadd [#allocation4], %s196
      %s198 = sshll.u32 [#allocation7], 4
      %s199 = int_to_ptr.vmem [resolvable:$true] %s198
      %204 = dma.vmem_to_hbm [thread:$0]  %s199, 256, %s2, [#allocation4], 128, 128, 8
    $region33: #{tpu_custom_call.1} parent=1 // pred_fallthru
      _
    // Predicated region
    $region34: #{tpu_custom_call.1} parent=1 // pred_check
      _
    $region35: #{tpu_custom_call.1} parent=1 // pred_check_branch
      %206 = sbr.rel (0) target = $region37
    $region36: #{tpu_custom_call.1} parent=1 // pred_region
      %207 = dma.done [#allocation4], 256
    $region37: #{tpu_custom_call.1} parent=1 // pred_fallthru
      _
    %208 = vsyncpa [#allocation3], 1
    %209 = vsyncpa [#allocation6], 1
    %210 = vsyncpa [#allocation4], 1

</llo_original>
